<compile_context>
chip_gen: v5e
topology: v5e:2x2
jax: 0.10.0
libtpu: 0.0.40
codegen_flags: <defaults>
</compile_context>

<pallas_src>
import jax
import jax.numpy as jnp
from jax.experimental import pallas as pl
from jax.experimental.pallas import tpu as pltpu


def _round_up(x, m):
    return (x + m - 1) // m * m


def ffnet_kernel(x_ref, w1_ref, b1_ref, w2_ref, b2_ref,
                 w3_ref, b3_ref, w4_ref, b4_ref, o_ref):
    # fc1 + relu: f32 tile loaded from HBM, cast to bf16 in-register (free VPU slot),
    # bf16 x bf16 MXU matmul with f32 accumulation, bias/ReLU in f32.
    h = x_ref[...].astype(jnp.bfloat16)
    h = jnp.dot(h, w1_ref[...], preferred_element_type=jnp.float32)
    h = jnp.maximum(h + b1_ref[...], 0.0).astype(jnp.bfloat16)
    # fc2 + relu
    h = jnp.dot(h, w2_ref[...], preferred_element_type=jnp.float32)
    h = jnp.maximum(h + b2_ref[...], 0.0).astype(jnp.bfloat16)
    # fc3 + relu
    h = jnp.dot(h, w3_ref[...], preferred_element_type=jnp.float32)
    h = jnp.maximum(h + b3_ref[...], 0.0).astype(jnp.bfloat16)
    # fc4 (no activation) — output block is exactly (TM, out_size), no lane padding.
    h = jnp.dot(h, w4_ref[...], preferred_element_type=jnp.float32)
    o_ref[...] = (h + b4_ref[...]).astype(o_ref.dtype)


def prepare_params(params):
    """One-time conversion: bf16 weights ([in,out]) + f32 biases ([1,out]).

    Do this once and reuse the result across forward calls so the per-call
    wrapper does no weight casting/padding work.
    """
    prep = {}
    for i in range(1, 5):
        prep[f"w{i}"] = params[f"w{i}"].astype(jnp.bfloat16)
        prep[f"b{i}"] = params[f"b{i}"].astype(jnp.float32)
    return prep


def ffnet_forward(x, prepared, *, tm=4096):
    """x: [B, input_size] f32; prepared: output of prepare_params().

    tm: target batch-tile rows per grid step. Large tiles amortize the ~0.35 us
    fixed per-step overhead; even tm=8192 of f32 in/out + f32/bf16 intermediates
    fits comfortably inside v7x's 64 MiB VMEM.
    """
    B, in_size = x.shape
    out_size = prepared["w4"].shape[1]

    # ---- Batch tiling: 16-row alignment (bf16 sublane pack), balanced tiles. ----
    align = 16
    b_pad = _round_up(B, align)
    n_steps = pl.cdiv(b_pad, min(max(tm, align), b_pad))
    tm_eff = _round_up(pl.cdiv(b_pad, n_steps), align)
    # v7x: two TensorCores — make sure a medium/large batch gets >= 2 parallel steps.
    if n_steps == 1 and b_pad >= 2 * align:
        n_steps = 2
        tm_eff = _round_up(pl.cdiv(b_pad, 2), align)
    b_pad = n_steps * tm_eff

    x_p = x if b_pad == B else jnp.pad(x, ((0, b_pad - B), (0, 0)))
    grid = (n_steps,)

    # ---- BlockSpecs (built in helpers: no loop-variable closure capture). ----
    def stream_spec(rows, cols):
        return pl.BlockSpec((rows, cols), lambda i: (i, 0))

    def resident_spec(arr):
        # Full-array block with a constant block index -> DMA'd once, stays
        # resident in VMEM across all grid steps.
        return pl.BlockSpec(arr.shape, lambda i: (0, 0))

    weight_args = []
    in_specs = [stream_spec(tm_eff, in_size)]
    for i in range(1, 5):
        wi = prepared[f"w{i}"]
        bi = prepared[f"b{i}"]
        weight_args += [wi, bi]
        in_specs += [resident_spec(wi), resident_spec(bi)]
    out_spec = stream_spec(tm_eff, out_size)

    # ---- VMEM budget: resident params + double-buffered in/out tiles +
    #      f32/bf16 intermediate activations, 2x headroom, generation-aware cap. ----
    resident_bytes = sum(
        int(prepared[f"w{i}"].size) * 2 + int(prepared[f"b{i}"].size) * 4
        for i in range(1, 5))
    hidden_dims = [prepared[f"w{i}"].shape[1] for i in range(1, 4)]
    stream_bytes = 2 * tm_eff * in_size * 4 + 2 * tm_eff * out_size * 4
    interm_bytes = tm_eff * sum(hidden_dims) * 6  # f32 acc + bf16 copy per hidden layer
    need = resident_bytes + stream_bytes + interm_bytes
    try:
        vmem_cap = int(pltpu.get_tpu_info().vmem_capacity_bytes)
    except Exception:
        vmem_cap = 64 << 20  # conservative (v7x per-TC VMEM)
    cap = max(vmem_cap - (16 << 20), 32 << 20)
    vmem_limit = int(min(max(2 * need, 4 << 20), cap))

    flops = 2 * b_pad * sum(
        prepared[f"w{i}"].shape[0] * prepared[f"w{i}"].shape[1] for i in range(1, 5))
    bytes_accessed = int(x_p.size) * 4 + resident_bytes + b_pad * out_size * 4
    cost = pl.CostEstimate(flops=flops, transcendentals=0,
                           bytes_accessed=bytes_accessed)

    out_padded = pl.pallas_call(
        ffnet_kernel,
        out_shape=jax.ShapeDtypeStruct((b_pad, out_size), jnp.float32),
        grid=grid,
        in_specs=in_specs,
        out_specs=out_spec,
        compiler_params=pltpu.CompilerParams(
            dimension_semantics=("parallel",),
            vmem_limit_bytes=vmem_limit),
        cost_estimate=cost,
    )(x_p, *weight_args)

    return out_padded[:B] if b_pad != B else out_padded


def init_params(key, input_size, output_size, hidden_size=64):
    """Deterministic init mirroring nn.Linear shapes (weights stored transposed)."""
    dims = [(input_size, 2 * hidden_size),
            (2 * hidden_size, hidden_size),
            (hidden_size, hidden_size),
            (hidden_size, output_size)]
    params = {}
    for i, (fan_in, fan_out) in enumerate(dims, start=1):
        key, kw, kb = jax.random.split(key, 3)
        bound = 1.0 / jnp.sqrt(fan_in)
        # PyTorch nn.Linear default: U(-1/sqrt(fan_in), 1/sqrt(fan_in))
        params[f"w{i}"] = jax.random.uniform(
            kw, (fan_in, fan_out), jnp.float32, -bound, bound)
        params[f"b{i}"] = jax.random.uniform(
            kb, (1, fan_out), jnp.float32, -bound, bound)
    return params


def ffnet_reference(x, params):
    """Pure-JAX reference matching the kernel's numerics (bf16 operands, f32 acc)."""
    def lin(h, wk, bk):
        hq = h.astype(jnp.bfloat16).astype(jnp.float32)
        wq = params[wk].astype(jnp.bfloat16).astype(jnp.float32)
        return jnp.dot(hq, wq, preferred_element_type=jnp.float32) + params[bk]
    h = jnp.maximum(lin(x, "w1", "b1"), 0.0)
    h = jnp.maximum(lin(h, "w2", "b2"), 0.0)
    h = jnp.maximum(lin(h, "w3", "b3"), 0.0)
    return lin(h, "w4", "b4")


if __name__ == "__main__":
    INPUT_SIZE = 16
    OUTPUT_SIZE = 8
    HIDDEN_SIZE = 32
    BATCH = 8

    key = jax.random.PRNGKey(0)
    key, kx = jax.random.split(key)
    x = jax.random.normal(kx, (BATCH, INPUT_SIZE), jnp.float32)
    params = init_params(key, INPUT_SIZE, OUTPUT_SIZE, HIDDEN_SIZE)
    prepared = prepare_params(params)   # one-time weight conversion

    fwd = jax.jit(ffnet_forward, static_argnames=("tm",))

    # Single-tile path (small batch).
    out = jax.block_until_ready(fwd(x, prepared))
    ref = ffnet_reference(x, params)
    assert out.shape == (BATCH, OUTPUT_SIZE)
    assert jnp.allclose(out, ref, atol=1e-4, rtol=1e-4)

    # Multi-tile path: exercise the batch grid + resident weights with a small tm.
    key, kx2 = jax.random.split(key)
    x2 = jax.random.normal(kx2, (24, INPUT_SIZE), jnp.float32)
    out2 = jax.block_until_ready(fwd(x2, prepared, tm=16))
    ref2 = ffnet_reference(x2, params)
    assert out2.shape == (24, OUTPUT_SIZE)
    assert jnp.allclose(out2, ref2, atol=1e-4, rtol=1e-4)

    print("KERNEL_OK")
</pallas_src>

<mosaic_0001>
module attributes {stable_mosaic.version = 11 : i64} {
  func.func @ffnet_kernel(%arg0: i32, %arg1: memref<16x16xf32, #tpu.memory_space<vmem>>, %arg2: memref<16x64xbf16, #tpu.memory_space<vmem>>, %arg3: memref<1x64xf32, #tpu.memory_space<vmem>>, %arg4: memref<64x32xbf16, #tpu.memory_space<vmem>>, %arg5: memref<1x32xf32, #tpu.memory_space<vmem>>, %arg6: memref<32x32xbf16, #tpu.memory_space<vmem>>, %arg7: memref<1x32xf32, #tpu.memory_space<vmem>>, %arg8: memref<32x8xbf16, #tpu.memory_space<vmem>>, %arg9: memref<1x8xf32, #tpu.memory_space<vmem>>, %arg10: memref<16x8xf32, #tpu.memory_space<vmem>>) attributes {dimension_semantics = [#tpu.dimension_semantics<parallel>], iteration_bounds = array<i64: 1>, scalar_prefetch = 0 : i64, scratch_operands = 0 : i64, tpu.core_type = #tpu.core_type<tc>, window_params = [{transform_indices = @transform_0, window_bounds = array<i64: 16, 16>}, {pipeline_mode = #tpu.pipeline_mode<synchronous>, transform_indices = @transform_1, window_bounds = array<i64: 16, 64>}, {pipeline_mode = #tpu.pipeline_mode<synchronous>, transform_indices = @transform_2, window_bounds = array<i64: 1, 64>}, {pipeline_mode = #tpu.pipeline_mode<synchronous>, transform_indices = @transform_3, window_bounds = array<i64: 64, 32>}, {pipeline_mode = #tpu.pipeline_mode<synchronous>, transform_indices = @transform_4, window_bounds = array<i64: 1, 32>}, {pipeline_mode = #tpu.pipeline_mode<synchronous>, transform_indices = @transform_5, window_bounds = array<i64: 32, 32>}, {pipeline_mode = #tpu.pipeline_mode<synchronous>, transform_indices = @transform_6, window_bounds = array<i64: 1, 32>}, {pipeline_mode = #tpu.pipeline_mode<synchronous>, transform_indices = @transform_7, window_bounds = array<i64: 32, 8>}, {pipeline_mode = #tpu.pipeline_mode<synchronous>, transform_indices = @transform_8, window_bounds = array<i64: 1, 8>}, {transform_indices = @transform_9, window_bounds = array<i64: 16, 8>}]} {
    %c0 = arith.constant 0 : index
    %c0_0 = arith.constant 0 : index
    %0 = vector.load %arg1[%c0, %c0_0] : memref<16x16xf32, #tpu.memory_space<vmem>>, vector<16x16xf32>
    %1 = arith.truncf %0 : vector<16x16xf32> to vector<16x16xbf16>
    %c0_1 = arith.constant 0 : index
    %c0_2 = arith.constant 0 : index
    %2 = vector.load %arg2[%c0_1, %c0_2] : memref<16x64xbf16, #tpu.memory_space<vmem>>, vector<16x64xbf16>
    %cst = arith.constant dense<0.000000e+00> : vector<16x64xf32>
    %3 = tpu.matmul %1, %2, %cst {dimension_numbers = #tpu.dot_dimension_numbers<[1], [0], [0], [1], [0, 0, 1, 1], [], []>} : vector<16x16xbf16>, vector<16x64xbf16>, vector<16x64xf32> -> vector<16x64xf32>
    %c0_3 = arith.constant 0 : index
    %c0_4 = arith.constant 0 : index
    %4 = vector.load %arg3[%c0_3, %c0_4] : memref<1x64xf32, #tpu.memory_space<vmem>>, vector<1x64xf32>
    %5 = vector.broadcast %4 : vector<1x64xf32> to vector<16x64xf32>
    %6 = arith.addf %3, %5 : vector<16x64xf32>
    %cst_5 = arith.constant 0.000000e+00 : f32
    %7 = vector.broadcast %cst_5 : f32 to vector<16x64xf32>
    %8 = arith.maximumf %6, %7 : vector<16x64xf32>
    %9 = arith.truncf %8 : vector<16x64xf32> to vector<16x64xbf16>
    %c0_6 = arith.constant 0 : index
    %c0_7 = arith.constant 0 : index
    %10 = vector.load %arg4[%c0_6, %c0_7] : memref<64x32xbf16, #tpu.memory_space<vmem>>, vector<64x32xbf16>
    %cst_8 = arith.constant dense<0.000000e+00> : vector<16x32xf32>
    %11 = tpu.matmul %9, %10, %cst_8 {dimension_numbers = #tpu.dot_dimension_numbers<[1], [0], [0], [1], [0, 0, 1, 1], [], []>} : vector<16x64xbf16>, vector<64x32xbf16>, vector<16x32xf32> -> vector<16x32xf32>
    %c0_9 = arith.constant 0 : index
    %c0_10 = arith.constant 0 : index
    %12 = vector.load %arg5[%c0_9, %c0_10] : memref<1x32xf32, #tpu.memory_space<vmem>>, vector<1x32xf32>
    %13 = vector.broadcast %12 : vector<1x32xf32> to vector<16x32xf32>
    %14 = arith.addf %11, %13 : vector<16x32xf32>
    %cst_11 = arith.constant 0.000000e+00 : f32
    %15 = vector.broadcast %cst_11 : f32 to vector<16x32xf32>
    %16 = arith.maximumf %14, %15 : vector<16x32xf32>
    %17 = arith.truncf %16 : vector<16x32xf32> to vector<16x32xbf16>
    %c0_12 = arith.constant 0 : index
    %c0_13 = arith.constant 0 : index
    %18 = vector.load %arg6[%c0_12, %c0_13] : memref<32x32xbf16, #tpu.memory_space<vmem>>, vector<32x32xbf16>
    %cst_14 = arith.constant dense<0.000000e+00> : vector<16x32xf32>
    %19 = tpu.matmul %17, %18, %cst_14 {dimension_numbers = #tpu.dot_dimension_numbers<[1], [0], [0], [1], [0, 0, 1, 1], [], []>} : vector<16x32xbf16>, vector<32x32xbf16>, vector<16x32xf32> -> vector<16x32xf32>
    %c0_15 = arith.constant 0 : index
    %c0_16 = arith.constant 0 : index
    %20 = vector.load %arg7[%c0_15, %c0_16] : memref<1x32xf32, #tpu.memory_space<vmem>>, vector<1x32xf32>
    %21 = vector.broadcast %20 : vector<1x32xf32> to vector<16x32xf32>
    %22 = arith.addf %19, %21 : vector<16x32xf32>
    %cst_17 = arith.constant 0.000000e+00 : f32
    %23 = vector.broadcast %cst_17 : f32 to vector<16x32xf32>
    %24 = arith.maximumf %22, %23 : vector<16x32xf32>
    %25 = arith.truncf %24 : vector<16x32xf32> to vector<16x32xbf16>
    %c0_18 = arith.constant 0 : index
    %c0_19 = arith.constant 0 : index
    %26 = vector.load %arg8[%c0_18, %c0_19] : memref<32x8xbf16, #tpu.memory_space<vmem>>, vector<32x8xbf16>
    %cst_20 = arith.constant dense<0.000000e+00> : vector<16x8xf32>
    %27 = tpu.matmul %25, %26, %cst_20 {dimension_numbers = #tpu.dot_dimension_numbers<[1], [0], [0], [1], [0, 0, 1, 1], [], []>} : vector<16x32xbf16>, vector<32x8xbf16>, vector<16x8xf32> -> vector<16x8xf32>
    %c0_21 = arith.constant 0 : index
    %c0_22 = arith.constant 0 : index
    %28 = vector.load %arg9[%c0_21, %c0_22] : memref<1x8xf32, #tpu.memory_space<vmem>>, vector<1x8xf32>
    %29 = vector.broadcast %28 : vector<1x8xf32> to vector<16x8xf32>
    %30 = arith.addf %27, %29 : vector<16x8xf32>
    %c0_23 = arith.constant 0 : index
    %c0_24 = arith.constant 0 : index
    %31 = vector.load %arg10[%c0_23, %c0_24] : memref<16x8xf32, #tpu.memory_space<vmem>>, vector<16x8xf32>
    tpu.vector_store %arg10[%c0_23, %c0_24], %30 {strides = array<i32>} : memref<16x8xf32, #tpu.memory_space<vmem>>, vector<16x8xf32>,
    return
  }
  func.func @transform_0(%arg0: i32) -> (i32, i32) {
    %c0_i32 = arith.constant 0 : i32
    %c0_i32_0 = arith.constant 0 : i32
    return %arg0, %c0_i32 : i32, i32
  }
  func.func @transform_1(%arg0: i32) -> (i32, i32) {
    %c0_i32 = arith.constant 0 : i32
    %c0_i32_0 = arith.constant 0 : i32
    %c0_i32_1 = arith.constant 0 : i32
    return %c0_i32, %c0_i32_0 : i32, i32
  }
  func.func @transform_2(%arg0: i32) -> (i32, i32) {
    %c0_i32 = arith.constant 0 : i32
    %c0_i32_0 = arith.constant 0 : i32
    %c0_i32_1 = arith.constant 0 : i32
    return %c0_i32, %c0_i32_0 : i32, i32
  }
  func.func @transform_3(%arg0: i32) -> (i32, i32) {
    %c0_i32 = arith.constant 0 : i32
    %c0_i32_0 = arith.constant 0 : i32
    %c0_i32_1 = arith.constant 0 : i32
    return %c0_i32, %c0_i32_0 : i32, i32
  }
  func.func @transform_4(%arg0: i32) -> (i32, i32) {
    %c0_i32 = arith.constant 0 : i32
    %c0_i32_0 = arith.constant 0 : i32
    %c0_i32_1 = arith.constant 0 : i32
    return %c0_i32, %c0_i32_0 : i32, i32
  }
  func.func @transform_5(%arg0: i32) -> (i32, i32) {
    %c0_i32 = arith.constant 0 : i32
    %c0_i32_0 = arith.constant 0 : i32
    %c0_i32_1 = arith.constant 0 : i32
    return %c0_i32, %c0_i32_0 : i32, i32
  }
  func.func @transform_6(%arg0: i32) -> (i32, i32) {
    %c0_i32 = arith.constant 0 : i32
    %c0_i32_0 = arith.constant 0 : i32
    %c0_i32_1 = arith.constant 0 : i32
    return %c0_i32, %c0_i32_0 : i32, i32
  }
  func.func @transform_7(%arg0: i32) -> (i32, i32) {
    %c0_i32 = arith.constant 0 : i32
    %c0_i32_0 = arith.constant 0 : i32
    %c0_i32_1 = arith.constant 0 : i32
    return %c0_i32, %c0_i32_0 : i32, i32
  }
  func.func @transform_8(%arg0: i32) -> (i32, i32) {
    %c0_i32 = arith.constant 0 : i32
    %c0_i32_0 = arith.constant 0 : i32
    %c0_i32_1 = arith.constant 0 : i32
    return %c0_i32, %c0_i32_0 : i32, i32
  }
  func.func @transform_9(%arg0: i32) -> (i32, i32) {
    %c0_i32 = arith.constant 0 : i32
    %c0_i32_0 = arith.constant 0 : i32
    return %arg0, %c0_i32 : i32, i32
  }
}

</mosaic_0001>

<llo_original>
// kernel: ffnet_forward.1
$region0: #{ffnet_forward.1}
  #allocation0 [shape = 'u32[]', space=smem, size = 0x4, offset = 0x4, fixed_abs, tag = 'smem constant byte address 0x4 - core index']
  #allocation1 [shape = 'u32[72,128]{1,0:T(1,128)}', space=vmem, size = 0x9000, scoped, tag = 'internal scratch']
  %s0 = inlined_call_operand.vmem [shape: f32[16,16], index: 0, kind: input, shape index: {}]
  %s1 = inlined_call_operand.vmem [shape: bf16[16,64], index: 1, kind: input, shape index: {}]
  %s2 = inlined_call_operand.vmem [shape: f32[1,64], index: 2, kind: input, shape index: {}]
  %s3 = inlined_call_operand.vmem [shape: bf16[64,32], index: 3, kind: input, shape index: {}]
  %s4 = inlined_call_operand.vmem [shape: f32[1,32], index: 4, kind: input, shape index: {}]
  %s5 = inlined_call_operand.vmem [shape: bf16[32,32], index: 5, kind: input, shape index: {}]
  %s6 = inlined_call_operand.vmem [shape: f32[1,32], index: 6, kind: input, shape index: {}]
  %s7 = inlined_call_operand.vmem [shape: bf16[32,8], index: 7, kind: input, shape index: {}]
  %s8 = inlined_call_operand.vmem [shape: f32[1,8], index: 8, kind: input, shape index: {}]
  %s9 = inlined_call_operand.vmem [shape: f32[16,8], index: 9, kind: output, shape index: {}]
  %s10 = sld [smem:[#allocation0]]
  $region46: #{ffnet_forward.1} parent=0
    _
  %s12 = ssub.s32 1, %s10
  %s13 = scalar_select 0, %s12, %s10
  // Predicated region
  $region2: #{ffnet_forward.1} parent=0 // pred_check
    _
  $region3: #{ffnet_forward.1} parent=0 // pred_check_branch
    %15 = sbr.rel (0) target = $region5
  $region4: #{ffnet_forward.1} parent=0 // pred_region
    _
  $region5: #{ffnet_forward.1} parent=0 // pred_fallthru
    _
  // Predicated region
  $region6: #{ffnet_forward.1} parent=0 // pred_check
    _
  $region7: #{ffnet_forward.1} parent=0 // pred_check_branch
    %17 = sbr.rel (0) target = $region9
  $region8: #{ffnet_forward.1} parent=0 // pred_region
    _
  $region9: #{ffnet_forward.1} parent=0 // pred_fallthru
    _
  // Predicated region
  $region10: #{ffnet_forward.1} parent=0 // pred_check
    _
  $region11: #{ffnet_forward.1} parent=0 // pred_check_branch
    %19 = sbr.rel (0) target = $region13
  $region12: #{ffnet_forward.1} parent=0 // pred_region
    _
  $region13: #{ffnet_forward.1} parent=0 // pred_fallthru
    _
  // Predicated region
  $region14: #{ffnet_forward.1} parent=0 // pred_check
    _
  $region15: #{ffnet_forward.1} parent=0 // pred_check_branch
    %21 = sbr.rel (0) target = $region17
  $region16: #{ffnet_forward.1} parent=0 // pred_region
    _
  $region17: #{ffnet_forward.1} parent=0 // pred_fallthru
    _
  // Predicated region
  $region18: #{ffnet_forward.1} parent=0 // pred_check
    _
  $region19: #{ffnet_forward.1} parent=0 // pred_check_branch
    %23 = sbr.rel (0) target = $region21
  $region20: #{ffnet_forward.1} parent=0 // pred_region
    _
  $region21: #{ffnet_forward.1} parent=0 // pred_fallthru
    _
  // Predicated region
  $region22: #{ffnet_forward.1} parent=0 // pred_check
    _
  $region23: #{ffnet_forward.1} parent=0 // pred_check_branch
    %25 = sbr.rel (0) target = $region25
  $region24: #{ffnet_forward.1} parent=0 // pred_region
    _
  $region25: #{ffnet_forward.1} parent=0 // pred_fallthru
    _
  // Predicated region
  $region26: #{ffnet_forward.1} parent=0 // pred_check
    _
  $region27: #{ffnet_forward.1} parent=0 // pred_check_branch
    %27 = sbr.rel (0) target = $region29
  $region28: #{ffnet_forward.1} parent=0 // pred_region
    _
  $region29: #{ffnet_forward.1} parent=0 // pred_fallthru
    _
  // Predicated region
  $region30: #{ffnet_forward.1} parent=0 // pred_check
    _
  $region31: #{ffnet_forward.1} parent=0 // pred_check_branch
    %29 = sbr.rel (0) target = $region33
  $region32: #{ffnet_forward.1} parent=0 // pred_region
    _
  $region33: #{ffnet_forward.1} parent=0 // pred_fallthru
    _
  // Predicated region
  $region34: #{ffnet_forward.1} parent=0 // pred_check
    _
  $region35: #{ffnet_forward.1} parent=0 // pred_check_branch
    %31 = sbr.rel (0) target = $region37
  $region36: #{ffnet_forward.1} parent=0 // pred_region
    _
  $region37: #{ffnet_forward.1} parent=0 // pred_fallthru
    _
  %v33 = vld [vmem:[%s0] sm:$0xff]
  %v34 = vld [vmem:[%s0 + $0x8] sm:$0xff]
  %v35 = vpack.c.bf16 %v34, %v33
  %v36 = vld [vmem:[%s1] sm:$0xf]
  %v37 = vld [vmem:[%s1 + $0x4] sm:$0xf]
  %v38 = vld [vmem:[%s2] sm:$0x1]
  %v40 = vperm.slane %v38, 0
  %v44 = vunpack.c.l.b16 %v36
  %v45 = vunpack.c.l.b16 %v37
  %v46 = vpack.c.b16 %v45, %v44
  %vm48 = vcmask 130048
  %v50 = vsel %vm48, %v35, 0
  %52 = vmatpush.bf16.msra.mxu0 0
  %53 = vmatpush.bf16.msra.mxu0 0
  %54 = vmatpush.bf16.msra.mxu0 0
  %55 = vmatpush.bf16.msra.mxu0 0
  %56 = vmatpush.bf16.msra.mxu0 0
  %57 = vmatpush.bf16.msra.mxu0 0
  %58 = vmatpush.bf16.msra.mxu0 0
  %59 = vmatpush.bf16.msra.mxu0 %v46
  %60 = vmatmul.bf16.gmra.mxu0 %v50
  %v61 = vpop.f32.mrf.mxu0
  %v62 = vadd.f32 %v40, %v61
  %v63 = vpop.f32.mrf.mxu0
  %v64 = vadd.f32 %v40, %v63
  %65 = vdwg.mxu0
  %v66 = vmax.f32 %v62, 0.0
  %v67 = vmax.f32 %v64, 0.0
  %v68 = vpack.c.bf16 %v67, %v66
  %v69 = vld [vmem:[%s3] sm:$0xf]
  %v70 = vld [vmem:[%s3 + $0x4] sm:$0xf]
  %v71 = vld [vmem:[%s3 + $0x8] sm:$0xf]
  %v72 = vld [vmem:[%s3 + $0xc] sm:$0xf]
  %v73 = vld [vmem:[%s3 + $0x10] sm:$0xf]
  %v74 = vld [vmem:[%s3 + $0x14] sm:$0xf]
  %v75 = vld [vmem:[%s3 + $0x18] sm:$0xf]
  %v76 = vld [vmem:[%s3 + $0x1c] sm:$0xf]
  %v77 = vld [vmem:[%s4] sm:$0x1]
  %v79 = vperm.slane %v77, 0
  %v89 = vunpack.c.l.b16 %v69
  %v90 = vunpack.c.l.b16 %v70
  %v91 = vunpack.c.l.b16 %v71
  %v92 = vunpack.c.l.b16 %v72
  %v93 = vunpack.c.l.b16 %v73
  %v94 = vunpack.c.l.b16 %v74
  %v95 = vunpack.c.l.b16 %v75
  %v96 = vunpack.c.l.b16 %v76
  %v97 = vpack.c.b16 %v90, %v89
  %v98 = vpack.c.b16 %v92, %v91
  %v99 = vpack.c.b16 %v94, %v93
  %v100 = vpack.c.b16 %v96, %v95
  %vm105 = vcmask 523264
  %v107 = vsel %vm105, %v68, 0
  %109 = vmatpush.bf16.msra.mxu0 0
  %110 = vmatpush.bf16.msra.mxu0 0
  %111 = vmatpush.bf16.msra.mxu0 0
  %112 = vmatpush.bf16.msra.mxu0 0
  %113 = vmatpush.bf16.msra.mxu0 %v100
  %114 = vmatpush.bf16.msra.mxu0 %v99
  %115 = vmatpush.bf16.msra.mxu0 %v98
  %116 = vmatpush.bf16.msra.mxu0 %v97
  %117 = vmatmul.bf16.gmra.mxu0 %v107
  %v118 = vpop.f32.mrf.mxu0
  %v119 = vadd.f32 %v79, %v118
  %v120 = vpop.f32.mrf.mxu0
  %v121 = vadd.f32 %v79, %v120
  %122 = vdwg.mxu0
  %v123 = vmax.f32 %v119, 0.0
  %v124 = vmax.f32 %v121, 0.0
  %v125 = vpack.c.bf16 %v124, %v123
  %v126 = vld [vmem:[%s5] sm:$0xf]
  %v127 = vld [vmem:[%s5 + $0x4] sm:$0xf]
  %v128 = vld [vmem:[%s5 + $0x8] sm:$0xf]
  %v129 = vld [vmem:[%s5 + $0xc] sm:$0xf]
  %v130 = vld [vmem:[%s6] sm:$0x1]
  %v132 = vperm.slane %v130, 0
  %v138 = vunpack.c.l.b16 %v126
  %v139 = vunpack.c.l.b16 %v127
  %v140 = vunpack.c.l.b16 %v128
  %v141 = vunpack.c.l.b16 %v129
  %v142 = vpack.c.b16 %v139, %v138
  %v143 = vpack.c.b16 %v141, %v140
  %vm146 = vcmask 261120
  %v148 = vsel %vm146, %v125, 0
  %150 = vmatpush.bf16.msra.mxu0 0
  %151 = vmatpush.bf16.msra.mxu0 0
  %152 = vmatpush.bf16.msra.mxu0 0
  %153 = vmatpush.bf16.msra.mxu0 0
  %154 = vmatpush.bf16.msra.mxu0 0
  %155 = vmatpush.bf16.msra.mxu0 0
  %156 = vmatpush.bf16.msra.mxu0 %v143
  %157 = vmatpush.bf16.msra.mxu0 %v142
  %158 = vmatmul.bf16.gmra.mxu0 %v148
  %v159 = vpop.f32.mrf.mxu0
  %v160 = vadd.f32 %v132, %v159
  %v161 = vpop.f32.mrf.mxu0
  %v162 = vadd.f32 %v132, %v161
  %163 = vdwg.mxu0
  %v164 = vmax.f32 %v160, 0.0
  %v165 = vmax.f32 %v162, 0.0
  %v166 = vpack.c.bf16 %v165, %v164
  %v167 = vld [vmem:[%s7] sm:$0xf]
  %v168 = vld [vmem:[%s7 + $0x4] sm:$0xf]
  %v169 = vld [vmem:[%s7 + $0x8] sm:$0xf]
  %v170 = vld [vmem:[%s7 + $0xc] sm:$0xf]
  %v171 = vld [vmem:[%s8] sm:$0x1]
  %v173 = vperm.slane %v171, 0
  %v179 = vunpack.c.l.b16 %v167
  %v180 = vunpack.c.l.b16 %v168
  %v181 = vunpack.c.l.b16 %v169
  %v182 = vunpack.c.l.b16 %v170
  %v183 = vpack.c.b16 %v180, %v179
  %v184 = vpack.c.b16 %v182, %v181
  %v188 = vsel %vm146, %v166, 0
  %190 = vmatpush.bf16.msra.mxu0 0
  %191 = vmatpush.bf16.msra.mxu0 0
  %192 = vmatpush.bf16.msra.mxu0 0
  %193 = vmatpush.bf16.msra.mxu0 0
  %194 = vmatpush.bf16.msra.mxu0 0
  %195 = vmatpush.bf16.msra.mxu0 0
  %196 = vmatpush.bf16.msra.mxu0 %v184
  %197 = vmatpush.bf16.msra.mxu0 %v183
  %198 = vmatmul.bf16.gmra.mxu0 %v188
  %v199 = vpop.f32.mrf.mxu0
  %v200 = vadd.f32 %v173, %v199
  %v201 = vpop.f32.mrf.mxu0
  %v202 = vadd.f32 %v173, %v201
  %203 = vdwg.mxu0
  %vm204 = vcmask 64512
  %205 = vst.msk [vmem:[%s9] sm:$0xff] %vm204, %v200
  %206 = vst.msk [vmem:[%s9 + $0x8] sm:$0xff] %vm204, %v202
  // Predicated region
  $region38: #{ffnet_forward.1} parent=0 // pred_check
    _
  $region39: #{ffnet_forward.1} parent=0 // pred_check_branch
    %208 = sbr.rel (0) target = $region41
  $region40: #{ffnet_forward.1} parent=0 // pred_region
    _
  $region41: #{ffnet_forward.1} parent=0 // pred_fallthru
    _
  // Predicated region
  $region42: #{ffnet_forward.1} parent=0 // pred_check
    _
  $region43: #{ffnet_forward.1} parent=0 // pred_check_branch
    %210 = sbr.rel (0) target = $region45
  $region44: #{ffnet_forward.1} parent=0 // pred_region
    _
  $region45: #{ffnet_forward.1} parent=0 // pred_fallthru
    _

</llo_original>
